<compile_context>
chip_gen: v7x
topology: tpu7x:2x2x1
jax: 0.10.0
libtpu: 0.0.40
codegen_flags: <defaults>
</compile_context>

<pallas_src>
import functools
import math
from typing import NamedTuple

import jax
import jax.numpy as jnp
from jax.experimental import pallas as pl
from jax.experimental.pallas import tpu as pltpu

BITS = 4


class PackedQLinear(NamedTuple):
    qweight: jax.Array      # [K//2, Np] uint8, block-half nibble packing
    scale: jax.Array        # [K//tile_k, groups_per_block, Np] f32
    zero: jax.Array         # [K//tile_k, groups_per_block, Np] f32
    bias: jax.Array         # [1, Np] f32
    in_features: int
    out_features: int
    padded_out: int
    group_size: int
    tile_k: int


def _round_up(a, b):
    return (a + b - 1) // b * b


def _choose_tile_k(K, group_size, tile_k_max):
    base = 2 * group_size
    assert K % base == 0, "in_features must be a multiple of 2*group_size"
    tile_k = base
    while tile_k * 2 <= tile_k_max and K % (tile_k * 2) == 0:
        tile_k *= 2
    return tile_k


def pack_quantized_weights(qweight, scale, zero, bias=None, *, bits=4,
                           group_size=128, tile_k_max=1024):
    """One-time (load-time) repack of QuantizedLinear parameters.

    [N, K//2] even/odd-nibble packing -> [K//2, Np] block-half packing: packed
    row (b*tk//2 + r) holds K index b*tk+r in its low nibble and K index
    b*tk + tk//2 + r in its high nibble, so the kernel dequantizes straight
    into natural (K, N) layout (no weight transpose through the XLU, and the
    activations are passed unchanged).  scale/zero go to [K-blocks, groups, Np].
    N is padded to a multiple of 256 (MXU-width tiles on v6e/v7x); padded
    output columns are zero and sliced off after the matmul.
    """
    assert bits == BITS, "only 4-bit packing implemented"
    N, packed = qweight.shape
    K = packed * 8 // bits
    assert K % group_size == 0 and group_size % 2 == 0
    tk = _choose_tile_k(K, group_size, tile_k_max)
    ngb = tk // group_size

    Np = _round_up(N, 256)

    q = qweight.astype(jnp.uint8)
    lo = q & jnp.uint8(0xF)
    hi = (q >> 4) & jnp.uint8(0xF)
    codes = jnp.stack([lo, hi], axis=-1).reshape(N, K)       # natural K order
    scale = scale.astype(jnp.float32)
    zero = zero.astype(jnp.float32)
    if bias is None:
        bias = jnp.zeros((N,), jnp.float32)
    bias = bias.astype(jnp.float32)
    if Np != N:
        codes = jnp.pad(codes, ((0, Np - N), (0, 0)))
        scale = jnp.pad(scale, ((0, Np - N), (0, 0)))
        zero = jnp.pad(zero, ((0, Np - N), (0, 0)))
        bias = jnp.pad(bias, (0, Np - N))

    codes_t = codes.T                                        # [K, Np]
    c = codes_t.reshape(K // tk, 2, tk // 2, Np)
    qw_p = (c[:, 0] | (c[:, 1] << 4)).reshape(K // 2, Np)    # uint8
    scale_r = scale.T.reshape(K // tk, ngb, Np)
    zero_r = zero.T.reshape(K // tk, ngb, Np)
    bias2 = bias.reshape(1, Np)
    return PackedQLinear(qw_p, scale_r, zero_r, bias2, K, N, Np, group_size, tk)


def _qlinear_kernel(x_ref, qw_ref, s_ref, z_ref, b_ref, o_ref, acc_ref, *,
                    group_size, tile_k):
    k = pl.program_id(2)

    @pl.when(k == 0)
    def _init():
        acc_ref[...] = jnp.zeros_like(acc_ref)

    half_k = tile_k // 2
    ngh = half_k // group_size            # groups in the low-nibble half

    s_all = s_ref[0]                      # (ngb, tile_n) f32
    z_all = z_ref[0]

    # qw block: (tile_k//2, tile_n) uint8.  Low nibble -> K rows
    # [k*tk, k*tk + tk/2), high nibble -> K rows [k*tk + tk/2, (k+1)*tk).
    # Dequantize + matmul one group at a time: live intermediates stay at
    # (group_size, tile_n) and VPU dequant of group g+1 overlaps the MXU dot
    # of group g.  Scale/zero broadcast along sublanes (no expand/materialize).
    for g in range(ngh):
        q = qw_ref[pl.ds(g * group_size, group_size), :].astype(jnp.int32)
        lo = (q & 0xF).astype(jnp.float32)
        hi = (q >> 4).astype(jnp.float32)          # q <= 255 -> already <= 0xF

        w_lo = ((lo - z_all[g:g + 1, :]) * s_all[g:g + 1, :]
                ).astype(jnp.bfloat16)
        w_hi = ((hi - z_all[ngh + g:ngh + g + 1, :])
                * s_all[ngh + g:ngh + g + 1, :]).astype(jnp.bfloat16)

        lo_start = pl.multiple_of(k * tile_k + g * group_size, group_size)
        hi_start = pl.multiple_of(k * tile_k + half_k + g * group_size,
                                  group_size)
        acc_ref[...] += jnp.dot(x_ref[:, pl.ds(lo_start, group_size)], w_lo,
                                preferred_element_type=jnp.float32)
        acc_ref[...] += jnp.dot(x_ref[:, pl.ds(hi_start, group_size)], w_hi,
                                preferred_element_type=jnp.float32)

    @pl.when(k == pl.num_programs(2) - 1)
    def _finalize():
        o_ref[...] = (acc_ref[...] + b_ref[...]).astype(o_ref.dtype)


def quantized_linear(x, packed: PackedQLinear, *, tile_m=256, tile_n=256,
                     x_slab_bytes=2 << 20):
    """Pallas forward for QuantizedLinear (no outlier weights).

    x: [..., in_features] -> [..., out_features] in x.dtype.
    """
    K, N, Np = packed.in_features, packed.out_features, packed.padded_out
    gs, tk = packed.group_size, packed.tile_k
    ngb = tk // gs
    *lead, kx = x.shape
    assert kx == K

    M = math.prod(lead) if lead else 1
    # Stream activations as bf16: halves x HBM traffic and the VMEM slab.
    x2 = x.reshape(M, K).astype(jnp.bfloat16)

    # x is K-resident per M-tile (reused across all N and K grid steps); cap
    # tile_m so the bf16 slab stays within a modest VMEM budget (works for
    # v7x's 64 MiB / 32 MiB scoped default as well as v5e/v6e).
    tm_cap = max(8, (x_slab_bytes // (2 * K)) // 8 * 8)
    tm = max(8, min(tile_m, tm_cap, _round_up(M, 8)))
    Mp = _round_up(M, tm)
    if Mp != M:
        x2 = jnp.pad(x2, ((0, Mp - M), (0, 0)))

    tn = tile_n if Np % tile_n == 0 else (256 if Np % 256 == 0 else 128)
    # v7x: if the parallel grid would be a single tile, shrink tn (>=128) so
    # both TensorCores get grid work.
    while (Mp // tm == 1 and Np // tn < 2 and tn > 128
           and (tn // 2) % 128 == 0):
        tn //= 2

    grid = (Mp // tm, Np // tn, K // tk)

    out = pl.pallas_call(
        functools.partial(_qlinear_kernel, group_size=gs, tile_k=tk),
        out_shape=jax.ShapeDtypeStruct((Mp, Np), x.dtype),
        grid_spec=pltpu.PrefetchScalarGridSpec(
            num_scalar_prefetch=0,
            grid=grid,
            in_specs=[
                # K-resident activation slab: DMA'd once per M-tile.
                pl.BlockSpec((tm, K), lambda i, j, k: (i, 0)),            # x
                pl.BlockSpec((tk // 2, tn), lambda i, j, k: (k, j)),      # qweight
                pl.BlockSpec((1, ngb, tn), lambda i, j, k: (k, 0, j)),    # scale
                pl.BlockSpec((1, ngb, tn), lambda i, j, k: (k, 0, j)),    # zero
                pl.BlockSpec((1, tn), lambda i, j, k: (0, j)),            # bias
            ],
            out_specs=pl.BlockSpec((tm, tn), lambda i, j, k: (i, j)),
            scratch_shapes=[pltpu.VMEM((tm, tn), jnp.float32)],
        ),
        compiler_params=pltpu.CompilerParams(
            dimension_semantics=("parallel", "parallel", "arbitrary")),
    )(x2, packed.qweight, packed.scale, packed.zero, packed.bias)

    out = out[:M, :N]
    return out.reshape(*lead, N)


def quantized_linear_unpacked(x, qweight, scale, zero, bias=None, *, bits=4,
                              group_size=128, **kwargs):
    """Convenience one-shot wrapper (packs weights on every call)."""
    packed = pack_quantized_weights(qweight, scale, zero, bias, bits=bits,
                                    group_size=group_size)
    return quantized_linear(x, packed, **kwargs)


def _reference(x, qweight, scale, zero, bias, group_size):
    """Pure-JAX reference: unpack -> dequantize -> F.linear."""
    N, packed = qweight.shape
    K = packed * 8 // BITS
    q = qweight.astype(jnp.int32)
    lo = q & 0xF
    hi = (q >> 4) & 0xF
    qw = jnp.stack([lo, hi], axis=-1).reshape(N, K).astype(jnp.float32)
    s = jnp.repeat(scale, group_size, axis=1)
    z = jnp.repeat(zero, group_size, axis=1)
    w = (qw - z) * s
    out = jnp.einsum("...k,nk->...n", x, w,
                     precision=jax.lax.Precision.HIGHEST)
    if bias is not None:
        out = out + bias
    return out


if __name__ == "__main__":
    # Small shapes consistent with the module: x [batch, seq, in_features].
    B, S = 2, 8
    in_features, out_features, group_size = 256, 256, 128

    key = jax.random.PRNGKey(0)
    k_q, k_s, k_z, k_b, k_x = jax.random.split(key, 5)

    # Deterministic synthetic parameters (module's __init__ only gives shapes).
    q_int = jax.random.randint(k_q, (out_features, in_features), 0, 16,
                               dtype=jnp.int32)
    qweight = (q_int[:, 0::2] | (q_int[:, 1::2] << 4)).astype(jnp.uint8)
    scale = jax.random.uniform(k_s, (out_features, in_features // group_size),
                               jnp.float32, 0.01, 0.1)
    zero = jax.random.uniform(k_z, (out_features, in_features // group_size),
                              jnp.float32, 0.0, 15.0)
    bias = jax.random.normal(k_b, (out_features,), jnp.float32)
    x = jax.random.normal(k_x, (B, S, in_features), jnp.float32)

    # Load-time step: pack once, reuse for every forward call.
    packed = pack_quantized_weights(qweight, scale, zero, bias,
                                    bits=4, group_size=group_size)
    jax.block_until_ready(packed)

    out = quantized_linear(x, packed)
    jax.block_until_ready(out)

    ref = _reference(x, qweight, scale, zero, bias, group_size)
    assert out.shape == (B, S, out_features)
    # bf16 MXU operands (f32 accumulation): tolerance relative to output scale.
    err = float(jnp.max(jnp.abs(out - ref)))
    tol = 1e-2 * float(jnp.max(jnp.abs(ref))) + 1e-2
    assert err <= tol, f"max abs err = {err} (tol {tol})"

    print("KERNEL_OK")
</pallas_src>

<mosaic_0001>
module attributes {stable_mosaic.version = 11 : i64} {
  func.func @_qlinear_kernel(%arg0: i32, %arg1: i32, %arg2: i32, %arg3: memref<16x256xbf16, #tpu.memory_space<vmem>>, %arg4: memref<128x128xi8, #tpu.memory_space<vmem>>, %arg5: memref<1x2x128xf32, #tpu.memory_space<vmem>>, %arg6: memref<1x2x128xf32, #tpu.memory_space<vmem>>, %arg7: memref<1x128xf32, #tpu.memory_space<vmem>>, %arg8: memref<16x128xf32, #tpu.memory_space<vmem>>, %arg9: memref<16x128xf32, #tpu.memory_space<vmem>>) attributes {dimension_semantics = [#tpu.dimension_semantics<parallel>, #tpu.dimension_semantics<parallel>, #tpu.dimension_semantics<arbitrary>], iteration_bounds = array<i64: 1, 2, 1>, scalar_prefetch = 0 : i64, scratch_operands = 1 : i64, tpu.core_type = #tpu.core_type<tc>, window_params = [{transform_indices = @transform_0, window_bounds = array<i64: 16, 256>}, {transform_indices = @transform_1, window_bounds = array<i64: 128, 128>}, {transform_indices = @transform_2, window_bounds = array<i64: 1, 2, 128>}, {transform_indices = @transform_3, window_bounds = array<i64: 1, 2, 128>}, {transform_indices = @transform_4, window_bounds = array<i64: 1, 128>}, {transform_indices = @transform_5, window_bounds = array<i64: 16, 128>}]} {
    %c0_i32 = arith.constant 0 : i32
    %0 = arith.cmpi eq, %arg2, %c0_i32 : i32
    %1 = arith.extui %0 : i1 to i32
    %c0_i32_0 = arith.constant 0 : i32
    %2 = arith.cmpi ne, %1, %c0_i32_0 : i32
    scf.if %2 {
      %cst_24 = arith.constant 0.000000e+00 : f32
      %51 = vector.broadcast %cst_24 : f32 to vector<16x128xf32>
      %c0_25 = arith.constant 0 : index
      %c0_26 = arith.constant 0 : index
      %52 = vector.load %arg9[%c0_25, %c0_26] : memref<16x128xf32, #tpu.memory_space<vmem>>, vector<16x128xf32>
      tpu.vector_store %arg9[%c0_25, %c0_26], %51 {strides = array<i32>} : memref<16x128xf32, #tpu.memory_space<vmem>>, vector<16x128xf32>,
    } else {
    }
    %c0 = arith.constant 0 : index
    %c0_1 = arith.constant 0 : index
    %c0_2 = arith.constant 0 : index
    %3 = vector.load %arg5[%c0, %c0_1, %c0_2] : memref<1x2x128xf32, #tpu.memory_space<vmem>>, vector<1x2x128xf32>
    %4 = vector.shape_cast %3 : vector<1x2x128xf32> to vector<2x128xf32>
    %c0_3 = arith.constant 0 : index
    %c0_4 = arith.constant 0 : index
    %c0_5 = arith.constant 0 : index
    %5 = vector.load %arg6[%c0_3, %c0_4, %c0_5] : memref<1x2x128xf32, #tpu.memory_space<vmem>>, vector<1x2x128xf32>
    %6 = vector.shape_cast %5 : vector<1x2x128xf32> to vector<2x128xf32>
    %c0_6 = arith.constant 0 : index
    %c0_7 = arith.constant 0 : index
    %7 = vector.load %arg4[%c0_6, %c0_7] : memref<128x128xi8, #tpu.memory_space<vmem>>, vector<128x128xi8>
    %8 = arith.extui %7 : vector<128x128xi8> to vector<128x128xi32>
    %c15_i32 = arith.constant 15 : i32
    %9 = vector.broadcast %c15_i32 : i32 to vector<128x128xi32>
    %10 = arith.andi %8, %9 : vector<128x128xi32>
    %11 = arith.sitofp %10 : vector<128x128xi32> to vector<128x128xf32>
    %c4_i32 = arith.constant 4 : i32
    %12 = vector.broadcast %c4_i32 : i32 to vector<128x128xi32>
    %13 = arith.shrsi %8, %12 : vector<128x128xi32>
    %14 = arith.sitofp %13 : vector<128x128xi32> to vector<128x128xf32>
    %15 = vector.extract_strided_slice %6 {offsets = [0, 0], sizes = [1, 128], strides = [1, 1]} : vector<2x128xf32> to vector<1x128xf32>
    %16 = vector.broadcast %15 : vector<1x128xf32> to vector<128x128xf32>
    %17 = arith.subf %11, %16 : vector<128x128xf32>
    %18 = vector.extract_strided_slice %4 {offsets = [0, 0], sizes = [1, 128], strides = [1, 1]} : vector<2x128xf32> to vector<1x128xf32>
    %19 = vector.broadcast %18 : vector<1x128xf32> to vector<128x128xf32>
    %20 = arith.mulf %17, %19 : vector<128x128xf32>
    %21 = arith.truncf %20 : vector<128x128xf32> to vector<128x128xbf16>
    %22 = vector.extract_strided_slice %6 {offsets = [1, 0], sizes = [1, 128], strides = [1, 1]} : vector<2x128xf32> to vector<1x128xf32>
    %23 = vector.broadcast %22 : vector<1x128xf32> to vector<128x128xf32>
    %24 = arith.subf %14, %23 : vector<128x128xf32>
    %25 = vector.extract_strided_slice %4 {offsets = [1, 0], sizes = [1, 128], strides = [1, 1]} : vector<2x128xf32> to vector<1x128xf32>
    %26 = vector.broadcast %25 : vector<1x128xf32> to vector<128x128xf32>
    %27 = arith.mulf %24, %26 : vector<128x128xf32>
    %28 = arith.truncf %27 : vector<128x128xf32> to vector<128x128xbf16>
    %c256_i32 = arith.constant 256 : i32
    %29 = arith.muli %arg2, %c256_i32 : i32
    %c0_i32_8 = arith.constant 0 : i32
    %30 = arith.addi %29, %c0_i32_8 : i32
    %31 = tpu.assume_multiple %30, 128 : i32
    %c256_i32_9 = arith.constant 256 : i32
    %32 = arith.muli %arg2, %c256_i32_9 : i32
    %c128_i32 = arith.constant 128 : i32
    %33 = arith.addi %32, %c128_i32 : i32
    %c0_i32_10 = arith.constant 0 : i32
    %34 = arith.addi %33, %c0_i32_10 : i32
    %35 = tpu.assume_multiple %34, 128 : i32
    %c0_11 = arith.constant 0 : index
    %c0_12 = arith.constant 0 : index
    %36 = vector.load %arg9[%c0_11, %c0_12] : memref<16x128xf32, #tpu.memory_space<vmem>>, vector<16x128xf32>
    %c0_13 = arith.constant 0 : index
    %37 = arith.index_cast %31 : i32 to index
    %38 = vector.load %arg3[%c0_13, %37] : memref<16x256xbf16, #tpu.memory_space<vmem>>, vector<16x128xbf16>
    %cst = arith.constant dense<0.000000e+00> : vector<16x128xf32>
    %39 = tpu.matmul %38, %21, %cst {dimension_numbers = #tpu.dot_dimension_numbers<[1], [0], [0], [1], [0, 0, 1, 1], [], []>} : vector<16x128xbf16>, vector<128x128xbf16>, vector<16x128xf32> -> vector<16x128xf32>
    %40 = arith.addf %36, %39 : vector<16x128xf32>
    %c0_14 = arith.constant 0 : index
    %c0_15 = arith.constant 0 : index
    %41 = vector.load %arg9[%c0_14, %c0_15] : memref<16x128xf32, #tpu.memory_space<vmem>>, vector<16x128xf32>
    tpu.vector_store %arg9[%c0_14, %c0_15], %40 {strides = array<i32>} : memref<16x128xf32, #tpu.memory_space<vmem>>, vector<16x128xf32>,
    %c0_16 = arith.constant 0 : index
    %c0_17 = arith.constant 0 : index
    %42 = vector.load %arg9[%c0_16, %c0_17] : memref<16x128xf32, #tpu.memory_space<vmem>>, vector<16x128xf32>
    %c0_18 = arith.constant 0 : index
    %43 = arith.index_cast %35 : i32 to index
    %44 = vector.load %arg3[%c0_18, %43] : memref<16x256xbf16, #tpu.memory_space<vmem>>, vector<16x128xbf16>
    %cst_19 = arith.constant dense<0.000000e+00> : vector<16x128xf32>
    %45 = tpu.matmul %44, %28, %cst_19 {dimension_numbers = #tpu.dot_dimension_numbers<[1], [0], [0], [1], [0, 0, 1, 1], [], []>} : vector<16x128xbf16>, vector<128x128xbf16>, vector<16x128xf32> -> vector<16x128xf32>
    %46 = arith.addf %42, %45 : vector<16x128xf32>
    %c0_20 = arith.constant 0 : index
    %c0_21 = arith.constant 0 : index
    %47 = vector.load %arg9[%c0_20, %c0_21] : memref<16x128xf32, #tpu.memory_space<vmem>>, vector<16x128xf32>
    tpu.vector_store %arg9[%c0_20, %c0_21], %46 {strides = array<i32>} : memref<16x128xf32, #tpu.memory_space<vmem>>, vector<16x128xf32>,
    %c0_i32_22 = arith.constant 0 : i32
    %48 = arith.cmpi eq, %arg2, %c0_i32_22 : i32
    %49 = arith.extui %48 : i1 to i32
    %c0_i32_23 = arith.constant 0 : i32
    %50 = arith.cmpi ne, %49, %c0_i32_23 : i32
    scf.if %50 {
      %c0_24 = arith.constant 0 : index
      %c0_25 = arith.constant 0 : index
      %51 = vector.load %arg9[%c0_24, %c0_25] : memref<16x128xf32, #tpu.memory_space<vmem>>, vector<16x128xf32>
      %c0_26 = arith.constant 0 : index
      %c0_27 = arith.constant 0 : index
      %52 = vector.load %arg7[%c0_26, %c0_27] : memref<1x128xf32, #tpu.memory_space<vmem>>, vector<1x128xf32>
      %53 = vector.broadcast %52 : vector<1x128xf32> to vector<16x128xf32>
      %54 = arith.addf %51, %53 : vector<16x128xf32>
      %c0_28 = arith.constant 0 : index
      %c0_29 = arith.constant 0 : index
      %55 = vector.load %arg8[%c0_28, %c0_29] : memref<16x128xf32, #tpu.memory_space<vmem>>, vector<16x128xf32>
      tpu.vector_store %arg8[%c0_28, %c0_29], %54 {strides = array<i32>} : memref<16x128xf32, #tpu.memory_space<vmem>>, vector<16x128xf32>,
    } else {
    }
    return
  }
  func.func @transform_0(%arg0: i32, %arg1: i32, %arg2: i32) -> (i32, i32) {
    %c0_i32 = arith.constant 0 : i32
    %c0_i32_0 = arith.constant 0 : i32
    return %arg0, %c0_i32 : i32, i32
  }
  func.func @transform_1(%arg0: i32, %arg1: i32, %arg2: i32) -> (i32, i32) {
    %c0_i32 = arith.constant 0 : i32
    return %arg2, %arg1 : i32, i32
  }
  func.func @transform_2(%arg0: i32, %arg1: i32, %arg2: i32) -> (i32, i32, i32) {
    %c0_i32 = arith.constant 0 : i32
    %c0_i32_0 = arith.constant 0 : i32
    return %arg2, %c0_i32, %arg1 : i32, i32, i32
  }
  func.func @transform_3(%arg0: i32, %arg1: i32, %arg2: i32) -> (i32, i32, i32) {
    %c0_i32 = arith.constant 0 : i32
    %c0_i32_0 = arith.constant 0 : i32
    return %arg2, %c0_i32, %arg1 : i32, i32, i32
  }
  func.func @transform_4(%arg0: i32, %arg1: i32, %arg2: i32) -> (i32, i32) {
    %c0_i32 = arith.constant 0 : i32
    %c0_i32_0 = arith.constant 0 : i32
    return %c0_i32, %arg1 : i32, i32
  }
  func.func @transform_5(%arg0: i32, %arg1: i32, %arg2: i32) -> (i32, i32) {
    %c0_i32 = arith.constant 0 : i32
    return %arg0, %arg1 : i32, i32
  }
}

</mosaic_0001>

<llo_original>
// kernel: tpu_custom_call.1
$region0: #{tpu_custom_call.1}
  #allocation0 [shape = 'u32[]', space=smem, size = 0x4, offset = 0x4, fixed_abs, tag = 'smem constant byte address 0x4 - core index']
  #allocation1 [shape = 'u32[144,128]{1,0:T(1,128)}', space=vmem, size = 0x12000, scoped, tag = 'internal scratch']
  #allocation2 [shape = 'f32[16,128]{1,0:T(8,128)}', space=vmem, size = 0x2000, scoped, tag = 'scratch operand']
  %s0 = inlined_call_operand.hbm [shape: bf16[16,256], index: 0, kind: input, shape index: {}]
  %s1 = inlined_call_operand.hbm [shape: u8[128,256], index: 1, kind: input, shape index: {}]
  %s2 = inlined_call_operand.vmem [shape: f32[1,2,256], index: 2, kind: input, shape index: {}]
  %s3 = inlined_call_operand.vmem [shape: f32[1,2,256], index: 3, kind: input, shape index: {}]
  %s4 = inlined_call_operand.vmem [shape: f32[1,256], index: 4, kind: input, shape index: {}]
  %s5 = inlined_call_operand.hbm [shape: f32[16,256], index: 5, kind: output, shape index: {}]
  %s6 = sld [smem:[#allocation0]]
  $region69: #{tpu_custom_call.1} parent=0
    _
  %s8 = ssub.s32 1, %s6
  %s9 = scalar_select 0, %s8, %s6
  $region1: #{tpu_custom_call.1} parent=0
    #allocation3 [shape = 'u8[8192]{0}', space=vmem, size = 0x2000, scoped, tag = 'input window, operand 0, single buffered']
    #allocation4 [shape = 's32[2]{0}', space=sflag, size = 0x8, scoped, tag = 'scoped memory for tpu_custom_call.1']
    #allocation5 [shape = 's32[2]{0}', space=sflag, size = 0x8, scoped, tag = 'scoped memory for tpu_custom_call.1']
    #allocation6 [shape = 'u8[32768]{0}', space=vmem, size = 0x8000, scoped, tag = 'input window, operand 1']
    #allocation7 [shape = 's32[2]{0}', space=sflag, size = 0x8, scoped, tag = 'scoped memory for tpu_custom_call.1']
    #allocation8 [shape = 'u8[16384]{0}', space=vmem, size = 0x4000, scoped, tag = 'output window, operand 0']
    %10 = vsyncpa [#allocation4], 0
    %11 = vsyncpa [#allocation7], 0
    %s12 = scalar_lea.sflag [#allocation7], 1
    %13 = vsyncpa %s12, 0
    %14 = vsyncpa [#allocation5], 0
    %s15 = scalar_lea.sflag [#allocation5], 1
    %16 = vsyncpa %s15, 0
    loop: start=0, step=1, limit=4
    $region2: #{tpu_custom_call.1} parent=1 // loop_pre_header
      _
    $region3: #{tpu_custom_call.1} parent=1 // loop_header
      %s18 = sphi 0, %s22
      %p19 = scmp.ge.s32.totalorder %s18, 4
      %s25 = sphi 0, %s44
      %s26 = sphi 0, %s40
      %s27 = sphi 0, %s36
      %s28 = sphi 0, %s25
      %s29 = sphi 0, %s26
      %s30 = sphi 0, %s27
      %s31 = sphi 0, %s28
      %s32 = sphi 0, %s29
      %s33 = sphi 0, %s30
      %s47 = sphi 0, %s49
      %s50 = sphi 0, %s47
      %s51 = sphi 0, %s50
      %s67 = sphi 0, %s51
      %s75 = sphi 0, %s77
      %s78 = sphi 0, %s75
      %s79 = sphi 0, %s78
      %s95 = sphi 0, %s79
      %s103 = sphi 0, %s105
      %s106 = sphi 0, %s103
      %s107 = sphi 0, %s106
      %s123 = sphi 0, %s107
      %s131 = sphi 0, %s133
      %s134 = sphi 0, %s131
      %s135 = sphi 0, %s134
      %s151 = sphi 0, %s135
      %s157 = sphi 0, %s159
      %s160 = sphi 0, %s157
      %s161 = sphi 0, %s160
      %s177 = sphi 0, %s161
      %s185 = sphi 0, %s187
      %s188 = sphi 0, %s185
      %s189 = sphi 0, %s188
      %s205 = sphi 0, %s189
    $region4: #{tpu_custom_call.1} parent=1 // loop_header_branch
      %21 = sbr.rel (%p19) target = $region8
    $region5: #{tpu_custom_call.1} parent=1 // loop_body
      %s23 = ssub.s32 %s18, 1
      %s24 = ssub.s32 %s18, 2
      %s34 = sadd.s32 1, %s27
      %p35 = scmp.ge.s32.totalorder %s34, 1
      %s36 = scalar_select %p35, 0, %s34
      %s37 = sadd.s32 1, %s26
      %s38 = scalar_select %p35, %s37, %s26
      %p39 = scmp.ge.s32.totalorder %s38, 2
      %s40 = scalar_select %p39, 0, %s38
      %s41 = sadd.s32 1, %s25
      %s42 = scalar_select %p39, %s41, %s25
      %p43 = scmp.ge.s32.totalorder %s42, 1
      %s44 = scalar_select %p43, 0, %s42
      %s45 = ssub.s32 %s25, %s44
      %p46 = scmp.eq.s32.totalorder %s45, 0
      %s48 = sadd.s32 %s47, 1
      %s49 = scalar_select %p46, %s47, %s48
      %p52 = pneg %p46
      %p53 = scmp.eq.s32.totalorder %s18, 1
      %p54 = por %p52, %p53
      %p55 = scmp.ne.s32.totalorder %s47, %s50
      %p56 = scmp.eq.s32.totalorder %s18, 0
      %p57 = por %p55, %p56
      %p58 = scmp.ne.s32.totalorder %s47, %s50
      %p59 = scmp.eq.s32.totalorder %s23, 1
      %p60 = por %p58, %p59
      %p61 = scmp.ne.s32.totalorder %s50, %s51
      %p62 = scmp.eq.s32.totalorder %s23, 0
      %p63 = por %p61, %p62
      %p64 = scmp.ne.s32.totalorder %s50, %s51
      %p65 = scmp.eq.s32.totalorder %s24, 1
      %p66 = por %p64, %p65
      %p68 = scmp.ne.s32.totalorder %s51, %s67
      %p69 = scmp.eq.s32.totalorder %s24, 0
      %p70 = por %p68, %p69
      %s71 = ssub.s32 %s27, %s36
      %s72 = ssub.s32 %s26, %s40
      %s73 = sor.u32 %s71, %s72
      %p74 = scmp.eq.s32.totalorder %s73, 0
      %s76 = sadd.s32 %s75, 1
      %s77 = scalar_select %p74, %s75, %s76
      %p80 = pneg %p74
      %p81 = scmp.eq.s32.totalorder %s18, 1
      %p82 = por %p80, %p81
      %p83 = scmp.ne.s32.totalorder %s75, %s78
      %p84 = scmp.eq.s32.totalorder %s18, 0
      %p85 = por %p83, %p84
      %p86 = scmp.ne.s32.totalorder %s75, %s78
      %p87 = scmp.eq.s32.totalorder %s23, 1
      %p88 = por %p86, %p87
      %p89 = scmp.ne.s32.totalorder %s78, %s79
      %p90 = scmp.eq.s32.totalorder %s23, 0
      %p91 = por %p89, %p90
      %p92 = scmp.ne.s32.totalorder %s78, %s79
      %p93 = scmp.eq.s32.totalorder %s24, 1
      %p94 = por %p92, %p93
      %p96 = scmp.ne.s32.totalorder %s79, %s95
      %p97 = scmp.eq.s32.totalorder %s24, 0
      %p98 = por %p96, %p97
      %s99 = ssub.s32 %s27, %s36
      %s100 = ssub.s32 %s26, %s40
      %s101 = sor.u32 %s99, %s100
      %p102 = scmp.eq.s32.totalorder %s101, 0
      %s104 = sadd.s32 %s103, 1
      %s105 = scalar_select %p102, %s103, %s104
      %p108 = pneg %p102
      %p109 = scmp.eq.s32.totalorder %s18, 1
      %p110 = por %p108, %p109
      %p111 = scmp.ne.s32.totalorder %s103, %s106
      %p112 = scmp.eq.s32.totalorder %s18, 0
      %p113 = por %p111, %p112
      %p114 = scmp.ne.s32.totalorder %s103, %s106
      %p115 = scmp.eq.s32.totalorder %s23, 1
      %p116 = por %p114, %p115
      %p117 = scmp.ne.s32.totalorder %s106, %s107
      %p118 = scmp.eq.s32.totalorder %s23, 0
      %p119 = por %p117, %p118
      %p120 = scmp.ne.s32.totalorder %s106, %s107
      %p121 = scmp.eq.s32.totalorder %s24, 1
      %p122 = por %p120, %p121
      %p124 = scmp.ne.s32.totalorder %s107, %s123
      %p125 = scmp.eq.s32.totalorder %s24, 0
      %p126 = por %p124, %p125
      %s127 = ssub.s32 %s27, %s36
      %s128 = ssub.s32 %s26, %s40
      %s129 = sor.u32 %s127, %s128
      %p130 = scmp.eq.s32.totalorder %s129, 0
      %s132 = sadd.s32 %s131, 1
      %s133 = scalar_select %p130, %s131, %s132
      %p136 = pneg %p130
      %p137 = scmp.eq.s32.totalorder %s18, 1
      %p138 = por %p136, %p137
      %p139 = scmp.ne.s32.totalorder %s131, %s134
      %p140 = scmp.eq.s32.totalorder %s18, 0
      %p141 = por %p139, %p140
      %p142 = scmp.ne.s32.totalorder %s131, %s134
      %p143 = scmp.eq.s32.totalorder %s23, 1
      %p144 = por %p142, %p143
      %p145 = scmp.ne.s32.totalorder %s134, %s135
      %p146 = scmp.eq.s32.totalorder %s23, 0
      %p147 = por %p145, %p146
      %p148 = scmp.ne.s32.totalorder %s134, %s135
      %p149 = scmp.eq.s32.totalorder %s24, 1
      %p150 = por %p148, %p149
      %p152 = scmp.ne.s32.totalorder %s135, %s151
      %p153 = scmp.eq.s32.totalorder %s24, 0
      %p154 = por %p152, %p153
      %s155 = ssub.s32 %s26, %s40
      %p156 = scmp.eq.s32.totalorder %s155, 0
      %s158 = sadd.s32 %s157, 1
      %s159 = scalar_select %p156, %s157, %s158
      %p162 = pneg %p156
      %p163 = scmp.eq.s32.totalorder %s18, 1
      %p164 = por %p162, %p163
      %p165 = scmp.ne.s32.totalorder %s157, %s160
      %p166 = scmp.eq.s32.totalorder %s18, 0
      %p167 = por %p165, %p166
      %p168 = scmp.ne.s32.totalorder %s157, %s160
      %p169 = scmp.eq.s32.totalorder %s23, 1
      %p170 = por %p168, %p169
      %p171 = scmp.ne.s32.totalorder %s160, %s161
      %p172 = scmp.eq.s32.totalorder %s23, 0
      %p173 = por %p171, %p172
      %p174 = scmp.ne.s32.totalorder %s160, %s161
      %p175 = scmp.eq.s32.totalorder %s24, 1
      %p176 = por %p174, %p175
      %p178 = scmp.ne.s32.totalorder %s161, %s177
      %p179 = scmp.eq.s32.totalorder %s24, 0
      %p180 = por %p178, %p179
      %s181 = ssub.s32 %s25, %s44
      %s182 = ssub.s32 %s26, %s40
      %s183 = sor.u32 %s181, %s182
      %p184 = scmp.eq.s32.totalorder %s183, 0
      %s186 = sadd.s32 %s185, 1
      %s187 = scalar_select %p184, %s185, %s186
      %p190 = pneg %p184
      %p191 = scmp.eq.s32.totalorder %s18, 1
      %p192 = por %p190, %p191
      %p193 = scmp.ne.s32.totalorder %s185, %s188
      %p194 = scmp.eq.s32.totalorder %s18, 0
      %p195 = por %p193, %p194
      %p196 = scmp.ne.s32.totalorder %s185, %s188
      %p197 = scmp.eq.s32.totalorder %s23, 1
      %p198 = por %p196, %p197
      %p199 = scmp.ne.s32.totalorder %s188, %s189
      %p200 = scmp.eq.s32.totalorder %s23, 0
      %p201 = por %p199, %p200
      %p202 = scmp.ne.s32.totalorder %s188, %s189
      %p203 = scmp.eq.s32.totalorder %s24, 1
      %p204 = por %p202, %p203
      %p206 = scmp.ne.s32.totalorder %s189, %s205
      %p207 = scmp.eq.s32.totalorder %s24, 0
      %p208 = por %p206, %p207
      %p209 = scmp.le.s32.totalorder 1, %s18
      %p210 = scmp.lt.s32.totalorder %s18, 3
      %p211 = pnand %p209, %p210
      %p212 = pneg %p211
      // Predicated region
      $region9: #{tpu_custom_call.1} parent=5 // pred_check
        _
      $region10: #{tpu_custom_call.1} parent=5 // pred_check_branch
        %214 = sbr.rel (%p211) target = $region12
      $region11: #{tpu_custom_call.1} parent=5 // pred_region
        %s215 = ssub.s32 %s18, 1
        // Predicated region
        $region13: #{tpu_custom_call.1} parent=11 // pred_check
          %p216 = pneg %p63
        $region14: #{tpu_custom_call.1} parent=11 // pred_check_branch
          %218 = sbr.rel (%p216) target = $region16
        $region15: #{tpu_custom_call.1} parent=11 // pred_region
          %s219 = smul.u32 2, %s28
          %s221 = ssub.s32 256, 256
          %222 = vsyncadd [#allocation4], %s221
          %s223 = smul.addr %s219, 2
          %s224 = smul.addr %s223, 64
          %s225 = scalar_lea.hbm %s0, %s224
          %s226 = sshll.u32 [#allocation3], 4
          %s227 = int_to_ptr.vmem [resolvable:$true] %s226
          %232 = dma.hbm_to_vmem [thread:$0]  %s225, 256, %s227, [#allocation4], 128, 128, 8
        $region16: #{tpu_custom_call.1} parent=11 // pred_fallthru
          _
      $region12: #{tpu_custom_call.1} parent=5 // pred_fallthru
        _
      %p233 = scmp.lt.s32.totalorder %s18, 2
      // Predicated region
      $region17: #{tpu_custom_call.1} parent=5 // pred_check
        %p234 = pneg %p233
      $region18: #{tpu_custom_call.1} parent=5 // pred_check_branch
        %236 = sbr.rel (%p234) target = $region20
      $region19: #{tpu_custom_call.1} parent=5 // pred_region
        // Predicated region
        $region21: #{tpu_custom_call.1} parent=19 // pred_check
          %p237 = pneg %p85
        $region22: #{tpu_custom_call.1} parent=19 // pred_check_branch
          %239 = sbr.rel (%p237) target = $region24
        $region23: #{tpu_custom_call.1} parent=19 // pred_region
          %s240 = sand.u32 %s75, 1
          %s241 = scalar_lea.sflag [#allocation7], %s240
          %s242 = sand.u32 %s75, 1
          %s243 = smul.addr %s242, 32
          %s244 = scalar_lea.vmem [#allocation6], %s243
          %s245 = smul.u32 4, %s27
          %s247 = ssub.s32 512, 512
          %248 = vsyncadd %s241, %s247
          %s249 = smul.addr %s245, 2
          %s250 = sadd.s32 %s26, %s249
          %s251 = smul.addr %s250, 128
          %s252 = scalar_lea.hbm %s1, %s251
          %s253 = sshll.u32 %s244, 4
          %s254 = int_to_ptr.vmem [resolvable:$true] %s253
          %259 = dma.hbm_to_vmem [thread:$0]  %s252, 512, %s254, %s241, 256, 128, 8
        $region24: #{tpu_custom_call.1} parent=19 // pred_fallthru
          _
        // Predicated region
        $region25: #{tpu_custom_call.1} parent=19 // pred_check
          %p260 = pneg %p113
        $region26: #{tpu_custom_call.1} parent=19 // pred_check_branch
          %262 = sbr.rel (%p260) target = $region28
        $region27: #{tpu_custom_call.1} parent=19 // pred_region
          %p263 = scmp.lt.s32.totalorder %s27, 0
          %s264 = scalar_select %p263, %s27, 0
          %p265 = scmp.lt.s32.totalorder %s26, 1
          %s266 = scalar_select %p265, %s26, 1
          %s267 = smul.addr %s264, 2
          %s268 = sadd.s32 %s266, %s267
          %s269 = smul.addr %s268, 2
          %s270 = scalar_lea.vmem %s2, %s269
        $region28: #{tpu_custom_call.1} parent=19 // pred_fallthru
          _
        // Predicated region
        $region29: #{tpu_custom_call.1} parent=19 // pred_check
          %p271 = pneg %p141
        $region30: #{tpu_custom_call.1} parent=19 // pred_check_branch
          %273 = sbr.rel (%p271) target = $region32
        $region31: #{tpu_custom_call.1} parent=19 // pred_region
          %p274 = scmp.lt.s32.totalorder %s27, 0
          %s275 = scalar_select %p274, %s27, 0
          %p276 = scmp.lt.s32.totalorder %s26, 1
          %s277 = scalar_select %p276, %s26, 1
          %s278 = smul.addr %s275, 2
          %s279 = sadd.s32 %s277, %s278
          %s280 = smul.addr %s279, 2
          %s281 = scalar_lea.vmem %s3, %s280
        $region32: #{tpu_custom_call.1} parent=19 // pred_fallthru
          _
        // Predicated region
        $region33: #{tpu_custom_call.1} parent=19 // pred_check
          %p282 = pneg %p167
        $region34: #{tpu_custom_call.1} parent=19 // pred_check_branch
          %284 = sbr.rel (%p282) target = $region36
        $region35: #{tpu_custom_call.1} parent=19 // pred_region
          %p285 = scmp.lt.s32.totalorder %s26, 1
          %s286 = scalar_select %p285, %s26, 1
          %s287 = scalar_lea.vmem %s4, %s286
        $region36: #{tpu_custom_call.1} parent=19 // pred_fallthru
          _
      $region20: #{tpu_custom_call.1} parent=5 // pred_fallthru
        _
      %p288 = scmp.le.s32.totalorder 1, %s18
      %p289 = scmp.lt.s32.totalorder %s18, 3
      %p290 = pnand %p288, %p289
      %p291 = pneg %p290
      // Predicated region
      $region37: #{tpu_custom_call.1} parent=5 // pred_check
        _
      $region38: #{tpu_custom_call.1} parent=5 // pred_check_branch
        %293 = sbr.rel (%p290) target = $region40
      $region39: #{tpu_custom_call.1} parent=5 // pred_region
        %s294 = ssub.s32 %s18, 1
        // Predicated region
        $region41: #{tpu_custom_call.1} parent=39 // pred_check
          %p295 = pneg %p63
        $region42: #{tpu_custom_call.1} parent=39 // pred_check_branch
          %297 = sbr.rel (%p295) target = $region44
        $region43: #{tpu_custom_call.1} parent=39 // pred_region
          %298 = dma.done [#allocation4], 256
        $region44: #{tpu_custom_call.1} parent=39 // pred_fallthru
          _
        %s299 = sand.u32 %s78, 1
        %s300 = scalar_lea.sflag [#allocation7], %s299
        %s301 = sand.u32 %s78, 1
        %s302 = smul.addr %s301, 32
        %s303 = scalar_lea.vmem [#allocation6], %s302
        // Predicated region
        $region45: #{tpu_custom_call.1} parent=39 // pred_check
          %p304 = pneg %p91
        $region46: #{tpu_custom_call.1} parent=39 // pred_check_branch
          %306 = sbr.rel (%p304) target = $region48
        $region47: #{tpu_custom_call.1} parent=39 // pred_region
          %307 = dma.done %s300, 512
        $region48: #{tpu_custom_call.1} parent=39 // pred_fallthru
          _
        %p308 = pneg %p63
        %p309 = pneg %p60
        %s310 = sand.u32 %s78, 1
        %s311 = scalar_lea.sflag [#allocation7], %s310
        %s312 = sand.u32 %s78, 1
        %s313 = smul.addr %s312, 32
        %s314 = scalar_lea.vmem [#allocation6], %s313
        %p315 = pneg %p91
        %p316 = pneg %p88
        %p317 = scmp.lt.s32.totalorder %s30, 0
        %s318 = scalar_select %p317, %s30, 0
        %p319 = scmp.lt.s32.totalorder %s29, 1
        %s320 = scalar_select %p319, %s29, 1
        %s321 = smul.addr %s318, 2
        %s322 = sadd.s32 %s320, %s321
        %s323 = smul.addr %s322, 2
        %s324 = scalar_lea.vmem %s2, %s323
        %p325 = pneg %p119
        %p326 = pneg %p116
        %p327 = scmp.lt.s32.totalorder %s30, 0
        %s328 = scalar_select %p327, %s30, 0
        %p329 = scmp.lt.s32.totalorder %s29, 1
        %s330 = scalar_select %p329, %s29, 1
        %s331 = smul.addr %s328, 2
        %s332 = sadd.s32 %s330, %s331
        %s333 = smul.addr %s332, 2
        %s334 = scalar_lea.vmem %s3, %s333
        %p335 = pneg %p147
        %p336 = pneg %p144
        %p337 = scmp.lt.s32.totalorder %s29, 1
        %s338 = scalar_select %p337, %s29, 1
        %s339 = scalar_lea.vmem %s4, %s338
        %p340 = pneg %p173
        %p341 = pneg %p170
        %p342 = pneg %p201
        %p343 = pneg %p198
        %s344 = sand.u32 %s188, 1
        %s345 = scalar_lea.sflag [#allocation5], %s344
        %s346 = sand.u32 %s188, 1
        %s347 = smul.addr %s346, 16
        %s348 = scalar_lea.vmem [#allocation8], %s347
        %s349 = smul.u32 2, %s28
        %s350 = smul.u32 4, %s30
        %p351 = scmp.lt.s32.totalorder %s30, 0
        %s352 = scalar_select %p351, %s30, 0
        %p353 = scmp.lt.s32.totalorder %s29, 1
        %s354 = scalar_select %p353, %s29, 1
        %s355 = smul.addr %s352, 2
        %s356 = sadd.s32 %s354, %s355
        %s357 = smul.addr %s356, 2
        %s358 = scalar_lea.vmem %s2, %s357
        %p359 = scmp.lt.s32.totalorder %s30, 0
        %s360 = scalar_select %p359, %s30, 0
        %p361 = scmp.lt.s32.totalorder %s29, 1
        %s362 = scalar_select %p361, %s29, 1
        %s363 = smul.addr %s360, 2
        %s364 = sadd.s32 %s362, %s363
        %s365 = smul.addr %s364, 2
        %s366 = scalar_lea.vmem %s3, %s365
        %p367 = scmp.lt.s32.totalorder %s29, 1
        %s368 = scalar_select %p367, %s29, 1
        %s369 = scalar_lea.vmem %s4, %s368
        %s370 = smul.u32 2, %s28
        %p372 = scmp.eq.s32.totalorder %s30, 0
        // Predicated region
        $region49: #{tpu_custom_call.1} parent=39 // pred_check
          %p373 = pneg %p372
        $region50: #{tpu_custom_call.1} parent=39 // pred_check_branch
          %375 = sbr.rel (%p373) target = $region52
        $region51: #{tpu_custom_call.1} parent=39 // pred_region
          %376 = vst [vmem:[#allocation2] sm:$0xff] 0.0
          %377 = vst [vmem:[#allocation2 + $0x8] sm:$0xff] 0.0
        $region52: #{tpu_custom_call.1} parent=39 // pred_fallthru
          _
        %v378 = vld [vmem:[%s358] sm:$0x3]
        %v379 = vld [vmem:[%s366] sm:$0x3]
        %v380 = vld [vmem:[%s303] sm:$0xff]
        %v381 = vld [vmem:[%s303 + $0x8] sm:$0xff]
        %v382 = vld [vmem:[%s303 + $0x10] sm:$0xff]
        %v383 = vld [vmem:[%s303 + $0x18] sm:$0xff]
        %v384 = vunpack.c.0.s8 %v380
        %v385 = vunpack.c.1.s8 %v380
        %v386 = vunpack.c.2.s8 %v380
        %v387 = vunpack.c.3.s8 %v380
        %v388 = vunpack.c.0.s8 %v381
        %v389 = vunpack.c.1.s8 %v381
        %v390 = vunpack.c.2.s8 %v381
        %v391 = vunpack.c.3.s8 %v381
        %v392 = vunpack.c.0.s8 %v382
        %v393 = vunpack.c.1.s8 %v382
        %v394 = vunpack.c.2.s8 %v382
        %v395 = vunpack.c.3.s8 %v382
        %v396 = vunpack.c.0.s8 %v383
        %v397 = vunpack.c.1.s8 %v383
        %v398 = vunpack.c.2.s8 %v383
        %v399 = vunpack.c.3.s8 %v383
        %v400 = vand.u32 %v384, 255
        %v401 = vand.u32 %v385, 255
        %v402 = vand.u32 %v386, 255
        %v403 = vand.u32 %v387, 255
        %v404 = vand.u32 %v388, 255
        %v405 = vand.u32 %v389, 255
        %v406 = vand.u32 %v390, 255
        %v407 = vand.u32 %v391, 255
        %v408 = vand.u32 %v392, 255
        %v409 = vand.u32 %v393, 255
        %v410 = vand.u32 %v394, 255
        %v411 = vand.u32 %v395, 255
        %v412 = vand.u32 %v396, 255
        %v413 = vand.u32 %v397, 255
        %v414 = vand.u32 %v398, 255
        %v415 = vand.u32 %v399, 255
        %v416 = vand.u32 %v400, 15
        %v417 = vand.u32 %v401, 15
        %v418 = vand.u32 %v402, 15
        %v419 = vand.u32 %v403, 15
        %v420 = vand.u32 %v404, 15
        %v421 = vand.u32 %v405, 15
        %v422 = vand.u32 %v406, 15
        %v423 = vand.u32 %v407, 15
        %v424 = vand.u32 %v408, 15
        %v425 = vand.u32 %v409, 15
        %v426 = vand.u32 %v410, 15
        %v427 = vand.u32 %v411, 15
        %v428 = vand.u32 %v412, 15
        %v429 = vand.u32 %v413, 15
        %v430 = vand.u32 %v414, 15
        %v431 = vand.u32 %v415, 15
        %v432 = vcvt.s32.f32 %v416
        %v433 = vcvt.s32.f32 %v417
        %v434 = vcvt.s32.f32 %v418
        %v435 = vcvt.s32.f32 %v419
        %v436 = vcvt.s32.f32 %v420
        %v437 = vcvt.s32.f32 %v421
        %v438 = vcvt.s32.f32 %v422
        %v439 = vcvt.s32.f32 %v423
        %v440 = vcvt.s32.f32 %v424
        %v441 = vcvt.s32.f32 %v425
        %v442 = vcvt.s32.f32 %v426
        %v443 = vcvt.s32.f32 %v427
        %v444 = vcvt.s32.f32 %v428
        %v445 = vcvt.s32.f32 %v429
        %v446 = vcvt.s32.f32 %v430
        %v447 = vcvt.s32.f32 %v431
        %v448 = vshra.s32 %v400, 4
        %v449 = vshra.s32 %v401, 4
        %v450 = vshra.s32 %v402, 4
        %v451 = vshra.s32 %v403, 4
        %v452 = vshra.s32 %v404, 4
        %v453 = vshra.s32 %v405, 4
        %v454 = vshra.s32 %v406, 4
        %v455 = vshra.s32 %v407, 4
        %v456 = vshra.s32 %v408, 4
        %v457 = vshra.s32 %v409, 4
        %v458 = vshra.s32 %v410, 4
        %v459 = vshra.s32 %v411, 4
        %v460 = vshra.s32 %v412, 4
        %v461 = vshra.s32 %v413, 4
        %v462 = vshra.s32 %v414, 4
        %v463 = vshra.s32 %v415, 4
        %v464 = vcvt.s32.f32 %v448
        %v465 = vcvt.s32.f32 %v449
        %v466 = vcvt.s32.f32 %v450
        %v467 = vcvt.s32.f32 %v451
        %v468 = vcvt.s32.f32 %v452
        %v469 = vcvt.s32.f32 %v453
        %v470 = vcvt.s32.f32 %v454
        %v471 = vcvt.s32.f32 %v455
        %v472 = vcvt.s32.f32 %v456
        %v473 = vcvt.s32.f32 %v457
        %v474 = vcvt.s32.f32 %v458
        %v475 = vcvt.s32.f32 %v459
        %v476 = vcvt.s32.f32 %v460
        %v477 = vcvt.s32.f32 %v461
        %v478 = vcvt.s32.f32 %v462
        %v479 = vcvt.s32.f32 %v463
        %v480 = vlaneseq
        %v481 = vshrl.u32 %v480, 7
        %v482 = vsub.s32 0, %v481
        %v483 = vrot.slane %v379, %v482
        %v484 = vsub.f32 %v432, %v483
        %v485 = vsub.f32 %v433, %v483
        %v486 = vsub.f32 %v434, %v483
        %v487 = vsub.f32 %v435, %v483
        %v488 = vsub.f32 %v436, %v483
        %v489 = vsub.f32 %v437, %v483
        %v490 = vsub.f32 %v438, %v483
        %v491 = vsub.f32 %v439, %v483
        %v492 = vsub.f32 %v440, %v483
        %v493 = vsub.f32 %v441, %v483
        %v494 = vsub.f32 %v442, %v483
        %v495 = vsub.f32 %v443, %v483
        %v496 = vsub.f32 %v444, %v483
        %v497 = vsub.f32 %v445, %v483
        %v498 = vsub.f32 %v446, %v483
        %v499 = vsub.f32 %v447, %v483
        %v500 = vlaneseq
        %v501 = vshrl.u32 %v500, 7
        %v502 = vsub.s32 0, %v501
        %v503 = vrot.slane %v378, %v502
        %v504 = vmul.f32 %v484, %v503
        %v505 = vmul.f32 %v485, %v503
        %v506 = vmul.f32 %v486, %v503
        %v507 = vmul.f32 %v487, %v503
        %v508 = vmul.f32 %v488, %v503
        %v509 = vmul.f32 %v489, %v503
        %v510 = vmul.f32 %v490, %v503
        %v511 = vmul.f32 %v491, %v503
        %v512 = vmul.f32 %v492, %v503
        %v513 = vmul.f32 %v493, %v503
        %v514 = vmul.f32 %v494, %v503
        %v515 = vmul.f32 %v495, %v503
        %v516 = vmul.f32 %v496, %v503
        %v517 = vmul.f32 %v497, %v503
        %v518 = vmul.f32 %v498, %v503
        %v519 = vmul.f32 %v499, %v503
        %v520 = vpack.c.bf16 %v505, %v504
        %v521 = vpack.c.bf16 %v507, %v506
        %v522 = vpack.c.bf16 %v509, %v508
        %v523 = vpack.c.bf16 %v511, %v510
        %v524 = vpack.c.bf16 %v513, %v512
        %v525 = vpack.c.bf16 %v515, %v514
        %v526 = vpack.c.bf16 %v517, %v516
        %v527 = vpack.c.bf16 %v519, %v518
        %v528 = vlaneseq
        %v529 = vshrl.u32 %v528, 7
        %v530 = vsub.s32 1, %v529
        %v531 = vrot.slane %v379, %v530
        %v532 = vsub.f32 %v464, %v531
        %v533 = vsub.f32 %v465, %v531
        %v534 = vsub.f32 %v466, %v531
        %v535 = vsub.f32 %v467, %v531
        %v536 = vsub.f32 %v468, %v531
        %v537 = vsub.f32 %v469, %v531
        %v538 = vsub.f32 %v470, %v531
        %v539 = vsub.f32 %v471, %v531
        %v540 = vsub.f32 %v472, %v531
        %v541 = vsub.f32 %v473, %v531
        %v542 = vsub.f32 %v474, %v531
        %v543 = vsub.f32 %v475, %v531
        %v544 = vsub.f32 %v476, %v531
        %v545 = vsub.f32 %v477, %v531
        %v546 = vsub.f32 %v478, %v531
        %v547 = vsub.f32 %v479, %v531
        %v548 = vlaneseq
        %v549 = vshrl.u32 %v548, 7
        %v550 = vsub.s32 1, %v549
        %v551 = vrot.slane %v378, %v550
        %v552 = vmul.f32 %v532, %v551
        %v553 = vmul.f32 %v533, %v551
        %v554 = vmul.f32 %v534, %v551
        %v555 = vmul.f32 %v535, %v551
        %v556 = vmul.f32 %v536, %v551
        %v557 = vmul.f32 %v537, %v551
        %v558 = vmul.f32 %v538, %v551
        %v559 = vmul.f32 %v539, %v551
        %v560 = vmul.f32 %v540, %v551
        %v561 = vmul.f32 %v541, %v551
        %v562 = vmul.f32 %v542, %v551
        %v563 = vmul.f32 %v543, %v551
        %v564 = vmul.f32 %v544, %v551
        %v565 = vmul.f32 %v545, %v551
        %v566 = vmul.f32 %v546, %v551
        %v567 = vmul.f32 %v547, %v551
        %v568 = vpack.c.bf16 %v553, %v552
        %v569 = vpack.c.bf16 %v555, %v554
        %v570 = vpack.c.bf16 %v557, %v556
        %v571 = vpack.c.bf16 %v559, %v558
        %v572 = vpack.c.bf16 %v561, %v560
        %v573 = vpack.c.bf16 %v563, %v562
        %v574 = vpack.c.bf16 %v565, %v564
        %v575 = vpack.c.bf16 %v567, %v566
        %s576 = smul.u32 %s30, 256
        %s577 = sadd.s32 %s576, 128
        %v578 = vld [vmem:[#allocation2] sm:$0xff]
        %v579 = vld [vmem:[#allocation2 + $0x8] sm:$0xff]
        %s580 = sshra.s32 %s576, 7
        %s581 = sand.u32 %s576, 127
        %s582 = smul.addr %s580, 4
        %s583 = scalar_lea.vmem [#allocation3], %s582
        %v584 = vld [vmem:[%s583] sm:$0xf]
        %v585 = vld [vmem:[%s583 + $0x8] sm:$0xf]
        %v588 = vunpack.c.l.b16 %v584
        %v589 = vunpack.c.l.b16 %v585
        %v590 = vpack.c.b16 %v589, %v588
        %592 = vmatprep.subr.bf16.mxu0 0
        %593 = vmatpush1.bf16.msra.mxu0 %v520
        %594 = vmatprep.subr.bf16.mxu0 0
        %595 = vmatpush1.bf16.msra.mxu0 %v521
        %596 = vmatprep.subr.bf16.mxu0 0
        %597 = vmatpush1.bf16.msra.mxu0 %v522
        %598 = vmatprep.subr.bf16.mxu0 0
        %599 = vmatpush1.bf16.msra.mxu0 %v523
        %600 = vmatprep.subr.bf16.mxu0 0
        %601 = vmatpush1.bf16.msra.mxu0 %v524
        %602 = vmatprep.subr.bf16.mxu0 0
        %603 = vmatpush1.bf16.msra.mxu0 %v525
        %604 = vmatprep.subr.bf16.mxu0 0
        %605 = vmatpush1.bf16.msra.mxu0 %v526
        %606 = vmatprep.subr.bf16.mxu0 0
        %607 = vmatpush1.bf16.msra.mxu0 %v527
        %608 = vmatprep.subr.bf16.mxu0 0
        %609 = vmatpush1.bf16.msra.mxu0 0
        %610 = vmatprep.subr.bf16.mxu0 0
        %611 = vmatpush1.bf16.msra.mxu0 0
        %612 = vmatprep.subr.bf16.mxu0 0
        %613 = vmatpush1.bf16.msra.mxu0 0
        %614 = vmatprep.subr.bf16.mxu0 0
        %615 = vmatpush1.bf16.msra.mxu0 0
        %616 = vmatprep.subr.bf16.mxu0 0
        %617 = vmatpush1.bf16.msra.mxu0 0
        %618 = vmatprep.subr.bf16.mxu0 0
        %619 = vmatpush1.bf16.msra.mxu0 0
        %620 = vmatprep.subr.bf16.mxu0 0
        %621 = vmatpush1.bf16.msra.mxu0 0
        %622 = vmatprep.subr.bf16.mxu0 0
        %623 = vmatpush1.bf16.msra.mxu0 0
        %624 = vmatprep.mubr.bf16.mxu0 0
        %625 = vmatmul.mubr.bf16.gmra.mrb[0].mxu0 %v590
        %v626 = vpop.f32.mrb[0].mxu0
        %v627 = vadd.f32 0.0, %v626
        %v628 = vpop.f32.mrb[0].mxu0
        %v629 = vpop.f32.mrb[0].mxu0
        %v630 = vadd.f32 0.0, %v629
        %v631 = vpop.f32.mrb[0].mxu0
        %632 = vdwg.mxu0
        %v633 = vadd.f32 %v578, %v627
        %v634 = vadd.f32 %v579, %v630
        %635 = vst [vmem:[#allocation2] sm:$0xff] %v633
        %636 = vst [vmem:[#allocation2 + $0x8] sm:$0xff] %v634
        %v637 = vld [vmem:[#allocation2] sm:$0xff]
        %v638 = vld [vmem:[#allocation2 + $0x8] sm:$0xff]
        %s639 = sshra.s32 %s577, 7
        %s640 = sand.u32 %s577, 127
        %s641 = smul.addr %s639, 4
        %s642 = scalar_lea.vmem [#allocation3], %s641
        %v643 = vld [vmem:[%s642] sm:$0xf]
        %v644 = vld [vmem:[%s642 + $0x8] sm:$0xf]
        %v647 = vunpack.c.l.b16 %v643
        %v648 = vunpack.c.l.b16 %v644
        %v649 = vpack.c.b16 %v648, %v647
        %651 = vmatprep.subr.bf16.mxu0 0
        %652 = vmatpush1.bf16.msra.mxu0 %v568
        %653 = vmatprep.subr.bf16.mxu0 0
        %654 = vmatpush1.bf16.msra.mxu0 %v569
        %655 = vmatprep.subr.bf16.mxu0 0
        %656 = vmatpush1.bf16.msra.mxu0 %v570
        %657 = vmatprep.subr.bf16.mxu0 0
        %658 = vmatpush1.bf16.msra.mxu0 %v571
        %659 = vmatprep.subr.bf16.mxu0 0
        %660 = vmatpush1.bf16.msra.mxu0 %v572
        %661 = vmatprep.subr.bf16.mxu0 0
        %662 = vmatpush1.bf16.msra.mxu0 %v573
        %663 = vmatprep.subr.bf16.mxu0 0
        %664 = vmatpush1.bf16.msra.mxu0 %v574
        %665 = vmatprep.subr.bf16.mxu0 0
        %666 = vmatpush1.bf16.msra.mxu0 %v575
        %667 = vmatprep.subr.bf16.mxu0 0
        %668 = vmatpush1.bf16.msra.mxu0 0
        %669 = vmatprep.subr.bf16.mxu0 0
        %670 = vmatpush1.bf16.msra.mxu0 0
        %671 = vmatprep.subr.bf16.mxu0 0
        %672 = vmatpush1.bf16.msra.mxu0 0
        %673 = vmatprep.subr.bf16.mxu0 0
        %674 = vmatpush1.bf16.msra.mxu0 0
        %675 = vmatprep.subr.bf16.mxu0 0
        %676 = vmatpush1.bf16.msra.mxu0 0
        %677 = vmatprep.subr.bf16.mxu0 0
        %678 = vmatpush1.bf16.msra.mxu0 0
        %679 = vmatprep.subr.bf16.mxu0 0
        %680 = vmatpush1.bf16.msra.mxu0 0
        %681 = vmatprep.subr.bf16.mxu0 0
        %682 = vmatpush1.bf16.msra.mxu0 0
        %683 = vmatprep.mubr.bf16.mxu0 0
        %684 = vmatmul.mubr.bf16.gmra.mrb[0].mxu0 %v649
        %v685 = vpop.f32.mrb[0].mxu0
        %v686 = vadd.f32 0.0, %v685
        %v687 = vpop.f32.mrb[0].mxu0
        %v688 = vpop.f32.mrb[0].mxu0
        %v689 = vadd.f32 0.0, %v688
        %v690 = vpop.f32.mrb[0].mxu0
        %691 = vdwg.mxu0
        %v692 = vadd.f32 %v637, %v686
        %v693 = vadd.f32 %v638, %v689
        %694 = vst [vmem:[#allocation2] sm:$0xff] %v692
        %695 = vst [vmem:[#allocation2 + $0x8] sm:$0xff] %v693
        // Predicated region
        $region53: #{tpu_custom_call.1} parent=39 // pred_check
          %p696 = pneg %p372
        $region54: #{tpu_custom_call.1} parent=39 // pred_check_branch
          %698 = sbr.rel (%p696) target = $region56
        $region55: #{tpu_custom_call.1} parent=39 // pred_region
          %v699 = vld [vmem:[#allocation2] sm:$0xff]
          %v700 = vld [vmem:[#allocation2 + $0x8] sm:$0xff]
          %v701 = vld [vmem:[%s369] sm:$0x1]
          %v703 = vlaneseq
          %v704 = vshrl.u32 %v703, 7
          %v705 = vsub.s32 0, %v704
          %v706 = vrot.slane %v701, %v705
          %v708 = vadd.f32 %v699, %v706
          %v709 = vadd.f32 %v700, %v706
          %710 = vst [vmem:[%s348] sm:$0xff] %v708
          %711 = vst [vmem:[%s348 + $0x8] sm:$0xff] %v709
        $region56: #{tpu_custom_call.1} parent=39 // pred_fallthru
          _
        %s712 = sand.u32 %s188, 1
        %s713 = scalar_lea.sflag [#allocation5], %s712
        %s714 = sand.u32 %s188, 1
        %s715 = smul.addr %s714, 16
        %s716 = scalar_lea.vmem [#allocation8], %s715
        // Predicated region
        $region57: #{tpu_custom_call.1} parent=39 // pred_check
          %p717 = pneg %p198
        $region58: #{tpu_custom_call.1} parent=39 // pred_check_branch
          %719 = sbr.rel (%p717) target = $region60
        $region59: #{tpu_custom_call.1} parent=39 // pred_region
          %s720 = smul.u32 2, %s28
          %s722 = ssub.s32 256, 256
          %723 = vsyncadd %s713, %s722
          %s724 = smul.addr %s720, 2
          %s725 = sadd.s32 %s29, %s724
          %s726 = smul.addr %s725, 128
          %s727 = scalar_lea.hbm %s5, %s726
          %s728 = sshll.u32 %s716, 4
          %s729 = int_to_ptr.vmem [resolvable:$true] %s728
          %734 = dma.vmem_to_hbm [thread:$0]  %s729, 256, %s727, %s713, 128, 256, 8
        $region60: #{tpu_custom_call.1} parent=39 // pred_fallthru
          _
      $region40: #{tpu_custom_call.1} parent=5 // pred_fallthru
        _
      %p735 = scmp.le.s32.totalorder 2, %s18
      // Predicated region
      $region61: #{tpu_custom_call.1} parent=5 // pred_check
        %p736 = pneg %p735
      $region62: #{tpu_custom_call.1} parent=5 // pred_check_branch
        %738 = sbr.rel (%p736) target = $region64
      $region63: #{tpu_custom_call.1} parent=5 // pred_region
        %s739 = ssub.s32 %s18, 2
        // Predicated region
        $region65: #{tpu_custom_call.1} parent=63 // pred_check
          %p740 = pneg %p204
        $region66: #{tpu_custom_call.1} parent=63 // pred_check_branch
          %742 = sbr.rel (%p740) target = $region68
        $region67: #{tpu_custom_call.1} parent=63 // pred_region
          %s743 = sand.u32 %s189, 1
          %s744 = scalar_lea.sflag [#allocation5], %s743
          %s745 = sand.u32 %s189, 1
          %s746 = smul.addr %s745, 16
          %s747 = scalar_lea.vmem [#allocation8], %s746
          %748 = dma.done %s744, 256
        $region68: #{tpu_custom_call.1} parent=63 // pred_fallthru
          _
      $region64: #{tpu_custom_call.1} parent=5 // pred_fallthru
        _
    $region6: #{tpu_custom_call.1} parent=1 // loop_footer
      %s22 = sadd.s32 1, %s18
    $region7: #{tpu_custom_call.1} parent=1 // loop_footer_branch
      %17 = sbr.rel target = $region3
    $region8: #{tpu_custom_call.1} parent=1 // loop_exit
      _
    %749 = vsyncpa [#allocation4], 1
    %s750 = scalar_lea.sflag [#allocation4], 1
    %751 = vsyncpa %s750, 1
    %752 = vsyncpa [#allocation7], 1
    %s753 = scalar_lea.sflag [#allocation7], 1
    %754 = vsyncpa %s753, 1
    %755 = vsyncpa [#allocation5], 1
    %s756 = scalar_lea.sflag [#allocation5], 1
    %757 = vsyncpa %s756, 1

</llo_original>
